<compile_context>
chip_gen: v5e
topology: v5e:2x2
jax: 0.10.0
libtpu: 0.0.40
codegen_flags: <defaults>
</compile_context>

<pallas_src>
import jax
import jax.numpy as jnp
from jax.experimental import pallas as pl
from jax.experimental.pallas import tpu as pltpu


def _round_up(v, m):
    return ((v + m - 1) // m) * m


def _pad2d(a, rows, cols):
    pr, pc = rows - a.shape[0], cols - a.shape[1]
    if pr or pc:
        a = jnp.pad(a, ((0, pr), (0, pc)))
    return a


def _make_mlp_kernel(layer_is_skip, hidden_dim, dot_dtype):
    n_layers = len(layer_is_skip)

    def kernel(*refs):
        # refs = [x_ref, z_ref, <per-layer weight parts + bias>, out_ref]
        x_ref, z_ref = refs[0], refs[1]
        out_ref = refs[-1]
        it = iter(refs[2:-1])

        y = x_ref[...].astype(jnp.float32)          # (tile_n, input_dim)
        z = z_ref[...].astype(dot_dtype)            # (tile_n, skip_dim)

        for li in range(n_layers):                  # unrolled at trace time
            if layer_is_skip[li]:
                w_y, w_z, b = next(it), next(it), next(it)
                # cat(y, z) @ W  ==  y @ W[:split] + z @ W[split:]
                acc = (jnp.dot(y.astype(dot_dtype), w_y[...],
                               preferred_element_type=jnp.float32)
                       + jnp.dot(z, w_z[...],
                                 preferred_element_type=jnp.float32))
            else:
                w, b = next(it), next(it)
                acc = jnp.dot(y.astype(dot_dtype), w[...],
                              preferred_element_type=jnp.float32)
            y = jnp.maximum(acc + b[...], 0.0)      # bias + ReLU in f32

        # Final store at the true width (padded columns are exact zeros).
        out_ref[...] = y[:, :hidden_dim].astype(out_ref.dtype)

    return kernel


def mlp_with_input_skips(x, z, weights, biases, input_skips, *, tile_n=2048,
                         dot_dtype=jnp.bfloat16):
    """x: (..., input_dim); z: (..., skip_dim); weights[i]: (dimin_i, dimout_i);
    biases[i]: (dimout_i,).  Returns (..., hidden_dim) in x.dtype."""
    input_skips = frozenset(int(s) for s in input_skips)
    n_layers = len(weights)
    input_dim = x.shape[-1]
    skip_dim = z.shape[-1]
    hidden_dim = int(weights[-1].shape[-1])

    xf = x.reshape(-1, input_dim)
    zf = z.reshape(-1, skip_dim)
    n = xf.shape[0]

    # Row tile must be a multiple of 8 (sublanes) or exactly n (full dim).
    if tile_n >= n:
        tile_n = n
    else:
        tile_n = max(8, (tile_n // 8) * 8)
    grid_n = pl.cdiv(n, tile_n)

    in_specs = [
        pl.BlockSpec((tile_n, input_dim), lambda i: (i, 0)),
        pl.BlockSpec((tile_n, skip_dim), lambda i: (i, 0)),
    ]

    # --- trace-time weight / bias preparation (padding & splitting) --------
    wb_args = []
    layer_is_skip = []
    flops = 0
    cur_pad_width = input_dim        # padded feature width of y entering layer li
    for li in range(n_layers):
        w = jnp.asarray(weights[li], dtype=jnp.float32)
        b = jnp.asarray(biases[li], dtype=jnp.float32)
        dimout = int(w.shape[1])
        out_pad = _round_up(dimout, 128)           # lane-dense hidden width
        is_skip = li in input_skips
        layer_is_skip.append(is_skip)

        if is_skip:
            split = int(w.shape[0]) - skip_dim     # = true width of y pre-concat
            w_y = _pad2d(w[:split, :], cur_pad_width, out_pad).astype(dot_dtype)
            w_z = _pad2d(w[split:, :], skip_dim, out_pad).astype(dot_dtype)
            parts = (w_y, w_z)
        else:
            parts = (_pad2d(w, cur_pad_width, out_pad).astype(dot_dtype),)

        b2 = _pad2d(b.reshape(1, -1), 1, out_pad)  # bias stays f32

        for p in parts:
            # Full-array block, constant index -> weight stays resident in VMEM.
            in_specs.append(pl.BlockSpec(p.shape, lambda i: (0, 0)))
            wb_args.append(p)
            flops += 2 * n * int(p.shape[0]) * int(p.shape[1])
        in_specs.append(pl.BlockSpec(b2.shape, lambda i: (0, 0)))
        wb_args.append(b2)

        cur_pad_width = out_pad

    out_dtype = x.dtype
    bytes_accessed = (
        n * (input_dim * jnp.dtype(xf.dtype).itemsize
             + skip_dim * jnp.dtype(zf.dtype).itemsize
             + hidden_dim * jnp.dtype(out_dtype).itemsize)
        + sum(int(a.size) * jnp.dtype(a.dtype).itemsize for a in wb_args))

    kernel = _make_mlp_kernel(tuple(layer_is_skip), hidden_dim, dot_dtype)

    out = pl.pallas_call(
        kernel,
        out_shape=jax.ShapeDtypeStruct((n, hidden_dim), out_dtype),
        grid=(grid_n,),
        in_specs=in_specs,
        out_specs=pl.BlockSpec((tile_n, hidden_dim), lambda i: (i, 0)),
        compiler_params=pltpu.CompilerParams(
            dimension_semantics=("parallel",),
            vmem_limit_bytes=64 * 1024 * 1024),
        cost_estimate=pl.CostEstimate(
            flops=flops, transcendentals=0, bytes_accessed=bytes_accessed),
    )(xf, zf, *wb_args)

    return out.reshape(x.shape[:-1] + (hidden_dim,))


def mlp_ref(x, z, weights, biases, input_skips):
    """Pure-JAX f32 reference matching the PyTorch forward."""
    hidden_dim = int(weights[-1].shape[-1])
    y = x.reshape(-1, x.shape[-1]).astype(jnp.float32)
    zf = z.reshape(-1, z.shape[-1]).astype(jnp.float32)
    for li, (w, b) in enumerate(zip(weights, biases)):
        if li in input_skips:
            y = jnp.concatenate([y, zf], axis=-1)
        y = jnp.maximum(y @ w.astype(jnp.float32) + b.astype(jnp.float32), 0.0)
    return y.reshape(x.shape[:-1] + (hidden_dim,))


if __name__ == "__main__":
    key = jax.random.PRNGKey(0)

    n_layers = 4
    input_dim = 16
    skip_dim = 16
    hidden_dim = 32
    input_skips = (2,)

    k_x, k_z, k_w = jax.random.split(key, 3)
    x = jax.random.normal(k_x, (2, 4, 16, input_dim), dtype=jnp.float32)
    z = jax.random.normal(k_z, (2, 4, 16, skip_dim), dtype=jnp.float32)

    weights, biases = [], []
    wkeys = jax.random.split(k_w, 2 * n_layers)
    for li in range(n_layers):
        if li == 0:
            dimin, dimout = input_dim, hidden_dim
        elif li in input_skips:
            dimin, dimout = hidden_dim + skip_dim, hidden_dim
        else:
            dimin, dimout = hidden_dim, hidden_dim
        w = (jax.random.normal(wkeys[2 * li], (dimin, dimout), dtype=jnp.float32)
             / jnp.sqrt(float(dimin)))
        b = 0.1 * jax.random.normal(wkeys[2 * li + 1], (dimout,), dtype=jnp.float32)
        weights.append(w)
        biases.append(b)

    ref = mlp_ref(x, z, weights, biases, input_skips)

    # 1) exact f32 mode, small tile so the grid has >1 step (exercises tiling)
    out_f32 = mlp_with_input_skips(x, z, weights, biases, input_skips,
                                   tile_n=64, dot_dtype=jnp.float32)
    out_f32 = jax.block_until_ready(out_f32)
    assert out_f32.shape == (2, 4, 16, hidden_dim), out_f32.shape
    err_f32 = float(jnp.abs(out_f32 - ref).max())
    assert jnp.allclose(out_f32, ref, atol=1e-4, rtol=1e-4), err_f32

    # 2) performance default: bf16 MXU operands, f32 accumulation
    out_bf16 = mlp_with_input_skips(x, z, weights, biases, input_skips)
    out_bf16 = jax.block_until_ready(out_bf16)
    assert out_bf16.shape == (2, 4, 16, hidden_dim), out_bf16.shape
    err_bf16 = float(jnp.abs(out_bf16 - ref).max())
    # loose tolerance: bf16 operand quantization vs the f32 reference
    assert jnp.allclose(out_bf16, ref, atol=5e-2, rtol=5e-2), err_bf16

    print("KERNEL_OK")
</pallas_src>

<mosaic_0001>
module attributes {stable_mosaic.version = 11 : i64} {
  func.func @kernel(%arg0: i32, %arg1: memref<64x16xf32, #tpu.memory_space<vmem>>, %arg2: memref<64x16xf32, #tpu.memory_space<vmem>>, %arg3: memref<16x128xf32, #tpu.memory_space<vmem>>, %arg4: memref<1x128xf32, #tpu.memory_space<vmem>>, %arg5: memref<128x128xf32, #tpu.memory_space<vmem>>, %arg6: memref<1x128xf32, #tpu.memory_space<vmem>>, %arg7: memref<128x128xf32, #tpu.memory_space<vmem>>, %arg8: memref<16x128xf32, #tpu.memory_space<vmem>>, %arg9: memref<1x128xf32, #tpu.memory_space<vmem>>, %arg10: memref<128x128xf32, #tpu.memory_space<vmem>>, %arg11: memref<1x128xf32, #tpu.memory_space<vmem>>, %arg12: memref<64x32xf32, #tpu.memory_space<vmem>>) attributes {dimension_semantics = [#tpu.dimension_semantics<parallel>], iteration_bounds = array<i64: 2>, scalar_prefetch = 0 : i64, scratch_operands = 0 : i64, tpu.core_type = #tpu.core_type<tc>, window_params = [{transform_indices = @transform_0, window_bounds = array<i64: 64, 16>}, {transform_indices = @transform_1, window_bounds = array<i64: 64, 16>}, {pipeline_mode = #tpu.pipeline_mode<synchronous>, transform_indices = @transform_2, window_bounds = array<i64: 16, 128>}, {pipeline_mode = #tpu.pipeline_mode<synchronous>, transform_indices = @transform_3, window_bounds = array<i64: 1, 128>}, {pipeline_mode = #tpu.pipeline_mode<synchronous>, transform_indices = @transform_4, window_bounds = array<i64: 128, 128>}, {pipeline_mode = #tpu.pipeline_mode<synchronous>, transform_indices = @transform_5, window_bounds = array<i64: 1, 128>}, {pipeline_mode = #tpu.pipeline_mode<synchronous>, transform_indices = @transform_6, window_bounds = array<i64: 128, 128>}, {pipeline_mode = #tpu.pipeline_mode<synchronous>, transform_indices = @transform_7, window_bounds = array<i64: 16, 128>}, {pipeline_mode = #tpu.pipeline_mode<synchronous>, transform_indices = @transform_8, window_bounds = array<i64: 1, 128>}, {pipeline_mode = #tpu.pipeline_mode<synchronous>, transform_indices = @transform_9, window_bounds = array<i64: 128, 128>}, {pipeline_mode = #tpu.pipeline_mode<synchronous>, transform_indices = @transform_10, window_bounds = array<i64: 1, 128>}, {transform_indices = @transform_11, window_bounds = array<i64: 64, 32>}]} {
    %c0 = arith.constant 0 : index
    %c0_0 = arith.constant 0 : index
    %0 = vector.load %arg1[%c0, %c0_0] : memref<64x16xf32, #tpu.memory_space<vmem>>, vector<64x16xf32>
    %c0_1 = arith.constant 0 : index
    %c0_2 = arith.constant 0 : index
    %1 = vector.load %arg2[%c0_1, %c0_2] : memref<64x16xf32, #tpu.memory_space<vmem>>, vector<64x16xf32>
    %c0_3 = arith.constant 0 : index
    %c0_4 = arith.constant 0 : index
    %2 = vector.load %arg3[%c0_3, %c0_4] : memref<16x128xf32, #tpu.memory_space<vmem>>, vector<16x128xf32>
    %cst = arith.constant dense<0.000000e+00> : vector<64x128xf32>
    %3 = tpu.matmul %0, %2, %cst {dimension_numbers = #tpu.dot_dimension_numbers<[1], [0], [0], [1], [0, 0, 1, 1], [], []>} : vector<64x16xf32>, vector<16x128xf32>, vector<64x128xf32> -> vector<64x128xf32>
    %c0_5 = arith.constant 0 : index
    %c0_6 = arith.constant 0 : index
    %4 = vector.load %arg4[%c0_5, %c0_6] : memref<1x128xf32, #tpu.memory_space<vmem>>, vector<1x128xf32>
    %5 = vector.broadcast %4 : vector<1x128xf32> to vector<64x128xf32>
    %6 = arith.addf %3, %5 : vector<64x128xf32>
    %cst_7 = arith.constant 0.000000e+00 : f32
    %7 = vector.broadcast %cst_7 : f32 to vector<64x128xf32>
    %8 = arith.maximumf %6, %7 : vector<64x128xf32>
    %c0_8 = arith.constant 0 : index
    %c0_9 = arith.constant 0 : index
    %9 = vector.load %arg5[%c0_8, %c0_9] : memref<128x128xf32, #tpu.memory_space<vmem>>, vector<128x128xf32>
    %cst_10 = arith.constant dense<0.000000e+00> : vector<64x128xf32>
    %10 = tpu.matmul %8, %9, %cst_10 {dimension_numbers = #tpu.dot_dimension_numbers<[1], [0], [0], [1], [0, 0, 1, 1], [], []>} : vector<64x128xf32>, vector<128x128xf32>, vector<64x128xf32> -> vector<64x128xf32>
    %c0_11 = arith.constant 0 : index
    %c0_12 = arith.constant 0 : index
    %11 = vector.load %arg6[%c0_11, %c0_12] : memref<1x128xf32, #tpu.memory_space<vmem>>, vector<1x128xf32>
    %12 = vector.broadcast %11 : vector<1x128xf32> to vector<64x128xf32>
    %13 = arith.addf %10, %12 : vector<64x128xf32>
    %cst_13 = arith.constant 0.000000e+00 : f32
    %14 = vector.broadcast %cst_13 : f32 to vector<64x128xf32>
    %15 = arith.maximumf %13, %14 : vector<64x128xf32>
    %c0_14 = arith.constant 0 : index
    %c0_15 = arith.constant 0 : index
    %16 = vector.load %arg7[%c0_14, %c0_15] : memref<128x128xf32, #tpu.memory_space<vmem>>, vector<128x128xf32>
    %cst_16 = arith.constant dense<0.000000e+00> : vector<64x128xf32>
    %17 = tpu.matmul %15, %16, %cst_16 {dimension_numbers = #tpu.dot_dimension_numbers<[1], [0], [0], [1], [0, 0, 1, 1], [], []>} : vector<64x128xf32>, vector<128x128xf32>, vector<64x128xf32> -> vector<64x128xf32>
    %c0_17 = arith.constant 0 : index
    %c0_18 = arith.constant 0 : index
    %18 = vector.load %arg8[%c0_17, %c0_18] : memref<16x128xf32, #tpu.memory_space<vmem>>, vector<16x128xf32>
    %cst_19 = arith.constant dense<0.000000e+00> : vector<64x128xf32>
    %19 = tpu.matmul %1, %18, %cst_19 {dimension_numbers = #tpu.dot_dimension_numbers<[1], [0], [0], [1], [0, 0, 1, 1], [], []>} : vector<64x16xf32>, vector<16x128xf32>, vector<64x128xf32> -> vector<64x128xf32>
    %20 = arith.addf %17, %19 : vector<64x128xf32>
    %c0_20 = arith.constant 0 : index
    %c0_21 = arith.constant 0 : index
    %21 = vector.load %arg9[%c0_20, %c0_21] : memref<1x128xf32, #tpu.memory_space<vmem>>, vector<1x128xf32>
    %22 = vector.broadcast %21 : vector<1x128xf32> to vector<64x128xf32>
    %23 = arith.addf %20, %22 : vector<64x128xf32>
    %cst_22 = arith.constant 0.000000e+00 : f32
    %24 = vector.broadcast %cst_22 : f32 to vector<64x128xf32>
    %25 = arith.maximumf %23, %24 : vector<64x128xf32>
    %c0_23 = arith.constant 0 : index
    %c0_24 = arith.constant 0 : index
    %26 = vector.load %arg10[%c0_23, %c0_24] : memref<128x128xf32, #tpu.memory_space<vmem>>, vector<128x128xf32>
    %cst_25 = arith.constant dense<0.000000e+00> : vector<64x128xf32>
    %27 = tpu.matmul %25, %26, %cst_25 {dimension_numbers = #tpu.dot_dimension_numbers<[1], [0], [0], [1], [0, 0, 1, 1], [], []>} : vector<64x128xf32>, vector<128x128xf32>, vector<64x128xf32> -> vector<64x128xf32>
    %c0_26 = arith.constant 0 : index
    %c0_27 = arith.constant 0 : index
    %28 = vector.load %arg11[%c0_26, %c0_27] : memref<1x128xf32, #tpu.memory_space<vmem>>, vector<1x128xf32>
    %29 = vector.broadcast %28 : vector<1x128xf32> to vector<64x128xf32>
    %30 = arith.addf %27, %29 : vector<64x128xf32>
    %cst_28 = arith.constant 0.000000e+00 : f32
    %31 = vector.broadcast %cst_28 : f32 to vector<64x128xf32>
    %32 = arith.maximumf %30, %31 : vector<64x128xf32>
    %33 = vector.extract_strided_slice %32 {offsets = [0, 0], sizes = [64, 32], strides = [1, 1]} : vector<64x128xf32> to vector<64x32xf32>
    %c0_29 = arith.constant 0 : index
    %c0_30 = arith.constant 0 : index
    %34 = vector.load %arg12[%c0_29, %c0_30] : memref<64x32xf32, #tpu.memory_space<vmem>>, vector<64x32xf32>
    tpu.vector_store %arg12[%c0_29, %c0_30], %33 {strides = array<i32>} : memref<64x32xf32, #tpu.memory_space<vmem>>, vector<64x32xf32>,
    return
  }
  func.func @transform_0(%arg0: i32) -> (i32, i32) {
    %c0_i32 = arith.constant 0 : i32
    %c0_i32_0 = arith.constant 0 : i32
    return %arg0, %c0_i32 : i32, i32
  }
  func.func @transform_1(%arg0: i32) -> (i32, i32) {
    %c0_i32 = arith.constant 0 : i32
    %c0_i32_0 = arith.constant 0 : i32
    return %arg0, %c0_i32 : i32, i32
  }
  func.func @transform_2(%arg0: i32) -> (i32, i32) {
    %c0_i32 = arith.constant 0 : i32
    %c0_i32_0 = arith.constant 0 : i32
    %c0_i32_1 = arith.constant 0 : i32
    return %c0_i32, %c0_i32_0 : i32, i32
  }
  func.func @transform_3(%arg0: i32) -> (i32, i32) {
    %c0_i32 = arith.constant 0 : i32
    %c0_i32_0 = arith.constant 0 : i32
    %c0_i32_1 = arith.constant 0 : i32
    return %c0_i32, %c0_i32_0 : i32, i32
  }
  func.func @transform_4(%arg0: i32) -> (i32, i32) {
    %c0_i32 = arith.constant 0 : i32
    %c0_i32_0 = arith.constant 0 : i32
    %c0_i32_1 = arith.constant 0 : i32
    return %c0_i32, %c0_i32_0 : i32, i32
  }
  func.func @transform_5(%arg0: i32) -> (i32, i32) {
    %c0_i32 = arith.constant 0 : i32
    %c0_i32_0 = arith.constant 0 : i32
    %c0_i32_1 = arith.constant 0 : i32
    return %c0_i32, %c0_i32_0 : i32, i32
  }
  func.func @transform_6(%arg0: i32) -> (i32, i32) {
    %c0_i32 = arith.constant 0 : i32
    %c0_i32_0 = arith.constant 0 : i32
    %c0_i32_1 = arith.constant 0 : i32
    return %c0_i32, %c0_i32_0 : i32, i32
  }
  func.func @transform_7(%arg0: i32) -> (i32, i32) {
    %c0_i32 = arith.constant 0 : i32
    %c0_i32_0 = arith.constant 0 : i32
    %c0_i32_1 = arith.constant 0 : i32
    return %c0_i32, %c0_i32_0 : i32, i32
  }
  func.func @transform_8(%arg0: i32) -> (i32, i32) {
    %c0_i32 = arith.constant 0 : i32
    %c0_i32_0 = arith.constant 0 : i32
    %c0_i32_1 = arith.constant 0 : i32
    return %c0_i32, %c0_i32_0 : i32, i32
  }
  func.func @transform_9(%arg0: i32) -> (i32, i32) {
    %c0_i32 = arith.constant 0 : i32
    %c0_i32_0 = arith.constant 0 : i32
    %c0_i32_1 = arith.constant 0 : i32
    return %c0_i32, %c0_i32_0 : i32, i32
  }
  func.func @transform_10(%arg0: i32) -> (i32, i32) {
    %c0_i32 = arith.constant 0 : i32
    %c0_i32_0 = arith.constant 0 : i32
    %c0_i32_1 = arith.constant 0 : i32
    return %c0_i32, %c0_i32_0 : i32, i32
  }
  func.func @transform_11(%arg0: i32) -> (i32, i32) {
    %c0_i32 = arith.constant 0 : i32
    %c0_i32_0 = arith.constant 0 : i32
    return %arg0, %c0_i32 : i32, i32
  }
}

</mosaic_0001>

<llo_original>
// kernel: tpu_custom_call.1
$region0: #{tpu_custom_call.1}
  #allocation0 [shape = 'u32[]', space=smem, size = 0x4, offset = 0x4, fixed_abs, tag = 'smem constant byte address 0x4 - core index']
  #allocation1 [shape = 'u32[72,128]{1,0:T(1,128)}', space=vmem, size = 0x9000, scoped, tag = 'internal scratch']
  %s0 = inlined_call_operand.vmem [shape: f32[128,16], index: 0, kind: input, shape index: {}]
  %s1 = inlined_call_operand.vmem [shape: f32[128,16], index: 1, kind: input, shape index: {}]
  %s2 = inlined_call_operand.vmem [shape: f32[16,128], index: 2, kind: input, shape index: {}]
  %s3 = inlined_call_operand.hbm [shape: f32[1,128], index: 3, kind: input, shape index: {}]
  %s4 = inlined_call_operand.vmem [shape: f32[128,128], index: 4, kind: input, shape index: {}]
  %s5 = inlined_call_operand.vmem [shape: f32[1,128], index: 5, kind: input, shape index: {}]
  %s6 = inlined_call_operand.vmem [shape: f32[128,128], index: 6, kind: input, shape index: {}]
  %s7 = inlined_call_operand.vmem [shape: f32[16,128], index: 7, kind: input, shape index: {}]
  %s8 = inlined_call_operand.vmem [shape: f32[1,128], index: 8, kind: input, shape index: {}]
  %s9 = inlined_call_operand.hbm [shape: f32[128,128], index: 9, kind: input, shape index: {}]
  %s10 = inlined_call_operand.vmem [shape: f32[1,128], index: 10, kind: input, shape index: {}]
  %s11 = inlined_call_operand.vmem [shape: f32[128,32], index: 11, kind: output, shape index: {}]
  %s12 = sld [smem:[#allocation0]]
  $region85: #{tpu_custom_call.1} parent=0
    _
  %s14 = ssub.s32 1, %s12
  %s15 = scalar_select 0, %s14, %s12
  $region1: #{tpu_custom_call.1} parent=0
    #allocation2 [shape = 'u8[512]{0}', space=vmem, size = 0x400, scoped, tag = 'input window, operand 3, single buffered']
    #allocation3 [shape = 's32[2]{0}', space=sflag, size = 0x8, scoped, tag = 'scoped memory for tpu_custom_call.1']
    #allocation4 [shape = 'u8[65536]{0}', space=vmem, size = 0x10000, scoped, tag = 'input window, operand 9, single buffered']
    #allocation5 [shape = 's32[1]{0}', space=sflag, size = 0x4, scoped, tag = 'scoped memory for tpu_custom_call.1']
    %16 = vsyncpa [#allocation3], 0
    %17 = vsyncpa [#allocation5], 0
    loop: start=0, step=1, limit=4
    $region2: #{tpu_custom_call.1} parent=1 // loop_pre_header
      _
    $region3: #{tpu_custom_call.1} parent=1 // loop_header
      %s19 = sphi 0, %s23
      %p20 = scmp.ge.s32.totalorder %s19, 4
      %s29 = sphi 0, %s31
      %s32 = sphi 0, %s29
      %s33 = sphi 0, %s32
      %s49 = sphi 0, %s33
      %s55 = sphi 0, %s57
      %s58 = sphi 0, %s55
      %s59 = sphi 0, %s58
      %s75 = sphi 0, %s59
      %s79 = sphi 0, %s79
      %s81 = sphi 0, %s79
      %s82 = sphi 0, %s81
      %s96 = sphi 0, %s82
      %s100 = sphi 0, %s100
      %s102 = sphi 0, %s100
      %s103 = sphi 0, %s102
      %s117 = sphi 0, %s103
      %s121 = sphi 0, %s121
      %s123 = sphi 0, %s121
      %s124 = sphi 0, %s123
      %s138 = sphi 0, %s124
      %s142 = sphi 0, %s142
      %s144 = sphi 0, %s142
      %s145 = sphi 0, %s144
      %s159 = sphi 0, %s145
      %s163 = sphi 0, %s163
      %s165 = sphi 0, %s163
      %s166 = sphi 0, %s165
      %s180 = sphi 0, %s166
      %s184 = sphi 0, %s184
      %s186 = sphi 0, %s184
      %s187 = sphi 0, %s186
      %s201 = sphi 0, %s187
      %s205 = sphi 0, %s205
      %s207 = sphi 0, %s205
      %s208 = sphi 0, %s207
      %s222 = sphi 0, %s208
      %s226 = sphi 0, %s226
      %s228 = sphi 0, %s226
      %s229 = sphi 0, %s228
      %s243 = sphi 0, %s229
      %s247 = sphi 0, %s247
      %s249 = sphi 0, %s247
      %s250 = sphi 0, %s249
      %s264 = sphi 0, %s250
      %s270 = sphi 0, %s272
      %s273 = sphi 0, %s270
      %s274 = sphi 0, %s273
      %s290 = sphi 0, %s274
    $region4: #{tpu_custom_call.1} parent=1 // loop_header_branch
      %22 = sbr.rel (%p20) target = $region8
    $region5: #{tpu_custom_call.1} parent=1 // loop_body
      %s24 = ssub.s32 %s19, 1
      %s25 = ssub.s32 %s19, 2
      %s26 = sadd.s32 %s19, 1
      %s27 = ssub.s32 %s19, %s26
      %p28 = scmp.eq.s32.totalorder %s27, 0
      %s30 = sadd.s32 %s29, 1
      %s31 = scalar_select %p28, %s29, %s30
      %p34 = pneg %p28
      %p35 = scmp.eq.s32.totalorder %s19, 1
      %p36 = por %p34, %p35
      %p37 = scmp.ne.s32.totalorder %s29, %s32
      %p38 = scmp.eq.s32.totalorder %s19, 0
      %p39 = por %p37, %p38
      %p40 = scmp.ne.s32.totalorder %s29, %s32
      %p41 = scmp.eq.s32.totalorder %s24, 1
      %p42 = por %p40, %p41
      %p43 = scmp.ne.s32.totalorder %s32, %s33
      %p44 = scmp.eq.s32.totalorder %s24, 0
      %p45 = por %p43, %p44
      %p46 = scmp.ne.s32.totalorder %s32, %s33
      %p47 = scmp.eq.s32.totalorder %s25, 1
      %p48 = por %p46, %p47
      %p50 = scmp.ne.s32.totalorder %s33, %s49
      %p51 = scmp.eq.s32.totalorder %s25, 0
      %p52 = por %p50, %p51
      %s53 = ssub.s32 %s19, %s26
      %p54 = scmp.eq.s32.totalorder %s53, 0
      %s56 = sadd.s32 %s55, 1
      %s57 = scalar_select %p54, %s55, %s56
      %p60 = pneg %p54
      %p61 = scmp.eq.s32.totalorder %s19, 1
      %p62 = por %p60, %p61
      %p63 = scmp.ne.s32.totalorder %s55, %s58
      %p64 = scmp.eq.s32.totalorder %s19, 0
      %p65 = por %p63, %p64
      %p66 = scmp.ne.s32.totalorder %s55, %s58
      %p67 = scmp.eq.s32.totalorder %s24, 1
      %p68 = por %p66, %p67
      %p69 = scmp.ne.s32.totalorder %s58, %s59
      %p70 = scmp.eq.s32.totalorder %s24, 0
      %p71 = por %p69, %p70
      %p72 = scmp.ne.s32.totalorder %s58, %s59
      %p73 = scmp.eq.s32.totalorder %s25, 1
      %p74 = por %p72, %p73
      %p76 = scmp.ne.s32.totalorder %s59, %s75
      %p77 = scmp.eq.s32.totalorder %s25, 0
      %p78 = por %p76, %p77
      %s80 = sadd.s32 %s79, 1
      %p83 = scmp.eq.s32.totalorder %s19, 1
      %p84 = scmp.ne.s32.totalorder %s79, %s81
      %p85 = scmp.eq.s32.totalorder %s19, 0
      %p86 = por %p84, %p85
      %p87 = scmp.ne.s32.totalorder %s79, %s81
      %p88 = scmp.eq.s32.totalorder %s24, 1
      %p89 = por %p87, %p88
      %p90 = scmp.ne.s32.totalorder %s81, %s82
      %p91 = scmp.eq.s32.totalorder %s24, 0
      %p92 = por %p90, %p91
      %p93 = scmp.ne.s32.totalorder %s81, %s82
      %p94 = scmp.eq.s32.totalorder %s25, 1
      %p95 = por %p93, %p94
      %p97 = scmp.ne.s32.totalorder %s82, %s96
      %p98 = scmp.eq.s32.totalorder %s25, 0
      %p99 = por %p97, %p98
      %s101 = sadd.s32 %s100, 1
      %p104 = scmp.eq.s32.totalorder %s19, 1
      %p105 = scmp.ne.s32.totalorder %s100, %s102
      %p106 = scmp.eq.s32.totalorder %s19, 0
      %p107 = por %p105, %p106
      %p108 = scmp.ne.s32.totalorder %s100, %s102
      %p109 = scmp.eq.s32.totalorder %s24, 1
      %p110 = por %p108, %p109
      %p111 = scmp.ne.s32.totalorder %s102, %s103
      %p112 = scmp.eq.s32.totalorder %s24, 0
      %p113 = por %p111, %p112
      %p114 = scmp.ne.s32.totalorder %s102, %s103
      %p115 = scmp.eq.s32.totalorder %s25, 1
      %p116 = por %p114, %p115
      %p118 = scmp.ne.s32.totalorder %s103, %s117
      %p119 = scmp.eq.s32.totalorder %s25, 0
      %p120 = por %p118, %p119
      %s122 = sadd.s32 %s121, 1
      %p125 = scmp.eq.s32.totalorder %s19, 1
      %p126 = scmp.ne.s32.totalorder %s121, %s123
      %p127 = scmp.eq.s32.totalorder %s19, 0
      %p128 = por %p126, %p127
      %p129 = scmp.ne.s32.totalorder %s121, %s123
      %p130 = scmp.eq.s32.totalorder %s24, 1
      %p131 = por %p129, %p130
      %p132 = scmp.ne.s32.totalorder %s123, %s124
      %p133 = scmp.eq.s32.totalorder %s24, 0
      %p134 = por %p132, %p133
      %p135 = scmp.ne.s32.totalorder %s123, %s124
      %p136 = scmp.eq.s32.totalorder %s25, 1
      %p137 = por %p135, %p136
      %p139 = scmp.ne.s32.totalorder %s124, %s138
      %p140 = scmp.eq.s32.totalorder %s25, 0
      %p141 = por %p139, %p140
      %s143 = sadd.s32 %s142, 1
      %p146 = scmp.eq.s32.totalorder %s19, 1
      %p147 = scmp.ne.s32.totalorder %s142, %s144
      %p148 = scmp.eq.s32.totalorder %s19, 0
      %p149 = por %p147, %p148
      %p150 = scmp.ne.s32.totalorder %s142, %s144
      %p151 = scmp.eq.s32.totalorder %s24, 1
      %p152 = por %p150, %p151
      %p153 = scmp.ne.s32.totalorder %s144, %s145
      %p154 = scmp.eq.s32.totalorder %s24, 0
      %p155 = por %p153, %p154
      %p156 = scmp.ne.s32.totalorder %s144, %s145
      %p157 = scmp.eq.s32.totalorder %s25, 1
      %p158 = por %p156, %p157
      %p160 = scmp.ne.s32.totalorder %s145, %s159
      %p161 = scmp.eq.s32.totalorder %s25, 0
      %p162 = por %p160, %p161
      %s164 = sadd.s32 %s163, 1
      %p167 = scmp.eq.s32.totalorder %s19, 1
      %p168 = scmp.ne.s32.totalorder %s163, %s165
      %p169 = scmp.eq.s32.totalorder %s19, 0
      %p170 = por %p168, %p169
      %p171 = scmp.ne.s32.totalorder %s163, %s165
      %p172 = scmp.eq.s32.totalorder %s24, 1
      %p173 = por %p171, %p172
      %p174 = scmp.ne.s32.totalorder %s165, %s166
      %p175 = scmp.eq.s32.totalorder %s24, 0
      %p176 = por %p174, %p175
      %p177 = scmp.ne.s32.totalorder %s165, %s166
      %p178 = scmp.eq.s32.totalorder %s25, 1
      %p179 = por %p177, %p178
      %p181 = scmp.ne.s32.totalorder %s166, %s180
      %p182 = scmp.eq.s32.totalorder %s25, 0
      %p183 = por %p181, %p182
      %s185 = sadd.s32 %s184, 1
      %p188 = scmp.eq.s32.totalorder %s19, 1
      %p189 = scmp.ne.s32.totalorder %s184, %s186
      %p190 = scmp.eq.s32.totalorder %s19, 0
      %p191 = por %p189, %p190
      %p192 = scmp.ne.s32.totalorder %s184, %s186
      %p193 = scmp.eq.s32.totalorder %s24, 1
      %p194 = por %p192, %p193
      %p195 = scmp.ne.s32.totalorder %s186, %s187
      %p196 = scmp.eq.s32.totalorder %s24, 0
      %p197 = por %p195, %p196
      %p198 = scmp.ne.s32.totalorder %s186, %s187
      %p199 = scmp.eq.s32.totalorder %s25, 1
      %p200 = por %p198, %p199
      %p202 = scmp.ne.s32.totalorder %s187, %s201
      %p203 = scmp.eq.s32.totalorder %s25, 0
      %p204 = por %p202, %p203
      %s206 = sadd.s32 %s205, 1
      %p209 = scmp.eq.s32.totalorder %s19, 1
      %p210 = scmp.ne.s32.totalorder %s205, %s207
      %p211 = scmp.eq.s32.totalorder %s19, 0
      %p212 = por %p210, %p211
      %p213 = scmp.ne.s32.totalorder %s205, %s207
      %p214 = scmp.eq.s32.totalorder %s24, 1
      %p215 = por %p213, %p214
      %p216 = scmp.ne.s32.totalorder %s207, %s208
      %p217 = scmp.eq.s32.totalorder %s24, 0
      %p218 = por %p216, %p217
      %p219 = scmp.ne.s32.totalorder %s207, %s208
      %p220 = scmp.eq.s32.totalorder %s25, 1
      %p221 = por %p219, %p220
      %p223 = scmp.ne.s32.totalorder %s208, %s222
      %p224 = scmp.eq.s32.totalorder %s25, 0
      %p225 = por %p223, %p224
      %s227 = sadd.s32 %s226, 1
      %p230 = scmp.eq.s32.totalorder %s19, 1
      %p231 = scmp.ne.s32.totalorder %s226, %s228
      %p232 = scmp.eq.s32.totalorder %s19, 0
      %p233 = por %p231, %p232
      %p234 = scmp.ne.s32.totalorder %s226, %s228
      %p235 = scmp.eq.s32.totalorder %s24, 1
      %p236 = por %p234, %p235
      %p237 = scmp.ne.s32.totalorder %s228, %s229
      %p238 = scmp.eq.s32.totalorder %s24, 0
      %p239 = por %p237, %p238
      %p240 = scmp.ne.s32.totalorder %s228, %s229
      %p241 = scmp.eq.s32.totalorder %s25, 1
      %p242 = por %p240, %p241
      %p244 = scmp.ne.s32.totalorder %s229, %s243
      %p245 = scmp.eq.s32.totalorder %s25, 0
      %p246 = por %p244, %p245
      %s248 = sadd.s32 %s247, 1
      %p251 = scmp.eq.s32.totalorder %s19, 1
      %p252 = scmp.ne.s32.totalorder %s247, %s249
      %p253 = scmp.eq.s32.totalorder %s19, 0
      %p254 = por %p252, %p253
      %p255 = scmp.ne.s32.totalorder %s247, %s249
      %p256 = scmp.eq.s32.totalorder %s24, 1
      %p257 = por %p255, %p256
      %p258 = scmp.ne.s32.totalorder %s249, %s250
      %p259 = scmp.eq.s32.totalorder %s24, 0
      %p260 = por %p258, %p259
      %p261 = scmp.ne.s32.totalorder %s249, %s250
      %p262 = scmp.eq.s32.totalorder %s25, 1
      %p263 = por %p261, %p262
      %p265 = scmp.ne.s32.totalorder %s250, %s264
      %p266 = scmp.eq.s32.totalorder %s25, 0
      %p267 = por %p265, %p266
      %s268 = ssub.s32 %s19, %s26
      %p269 = scmp.eq.s32.totalorder %s268, 0
      %s271 = sadd.s32 %s270, 1
      %s272 = scalar_select %p269, %s270, %s271
      %p275 = pneg %p269
      %p276 = scmp.eq.s32.totalorder %s19, 1
      %p277 = por %p275, %p276
      %p278 = scmp.ne.s32.totalorder %s270, %s273
      %p279 = scmp.eq.s32.totalorder %s19, 0
      %p280 = por %p278, %p279
      %p281 = scmp.ne.s32.totalorder %s270, %s273
      %p282 = scmp.eq.s32.totalorder %s24, 1
      %p283 = por %p281, %p282
      %p284 = scmp.ne.s32.totalorder %s273, %s274
      %p285 = scmp.eq.s32.totalorder %s24, 0
      %p286 = por %p284, %p285
      %p287 = scmp.ne.s32.totalorder %s273, %s274
      %p288 = scmp.eq.s32.totalorder %s25, 1
      %p289 = por %p287, %p288
      %p291 = scmp.ne.s32.totalorder %s274, %s290
      %p292 = scmp.eq.s32.totalorder %s25, 0
      %p293 = por %p291, %p292
      %p294 = scmp.le.s32.totalorder 1, %s19
      %p295 = scmp.lt.s32.totalorder %s19, 3
      %p296 = pnand %p294, %p295
      %p297 = pneg %p296
      // Predicated region
      $region9: #{tpu_custom_call.1} parent=5 // pred_check
        _
      $region10: #{tpu_custom_call.1} parent=5 // pred_check_branch
        %299 = sbr.rel (%p296) target = $region12
      $region11: #{tpu_custom_call.1} parent=5 // pred_region
        %s300 = ssub.s32 %s19, 1
        // Predicated region
        $region13: #{tpu_custom_call.1} parent=11 // pred_check
          %p301 = pneg %p92
        $region14: #{tpu_custom_call.1} parent=11 // pred_check_branch
          %303 = sbr.rel (%p301) target = $region16
        $region15: #{tpu_custom_call.1} parent=11 // pred_region
          _
        $region16: #{tpu_custom_call.1} parent=11 // pred_fallthru
          _
        // Predicated region
        $region17: #{tpu_custom_call.1} parent=11 // pred_check
          %p304 = pneg %p113
        $region18: #{tpu_custom_call.1} parent=11 // pred_check_branch
          %306 = sbr.rel (%p304) target = $region20
        $region19: #{tpu_custom_call.1} parent=11 // pred_region
          %308 = vsyncadd [#allocation3], 0
          %s310 = sshll.u32 %s3, 4
          %s311 = int_to_ptr.hbm [resolvable:$true] %s310
          %s312 = sshll.u32 [#allocation2], 4
          %s313 = int_to_ptr.vmem [resolvable:$true] %s312
          %315 = dma.hbm_to_vmem [thread:$0]  %s311, 16, %s313, [#allocation3]
        $region20: #{tpu_custom_call.1} parent=11 // pred_fallthru
          _
        // Predicated region
        $region21: #{tpu_custom_call.1} parent=11 // pred_check
          %p316 = pneg %p134
        $region22: #{tpu_custom_call.1} parent=11 // pred_check_branch
          %318 = sbr.rel (%p316) target = $region24
        $region23: #{tpu_custom_call.1} parent=11 // pred_region
          _
        $region24: #{tpu_custom_call.1} parent=11 // pred_fallthru
          _
        // Predicated region
        $region25: #{tpu_custom_call.1} parent=11 // pred_check
          %p319 = pneg %p155
        $region26: #{tpu_custom_call.1} parent=11 // pred_check_branch
          %321 = sbr.rel (%p319) target = $region28
        $region27: #{tpu_custom_call.1} parent=11 // pred_region
          _
        $region28: #{tpu_custom_call.1} parent=11 // pred_fallthru
          _
        // Predicated region
        $region29: #{tpu_custom_call.1} parent=11 // pred_check
          %p322 = pneg %p176
        $region30: #{tpu_custom_call.1} parent=11 // pred_check_branch
          %324 = sbr.rel (%p322) target = $region32
        $region31: #{tpu_custom_call.1} parent=11 // pred_region
          _
        $region32: #{tpu_custom_call.1} parent=11 // pred_fallthru
          _
        // Predicated region
        $region33: #{tpu_custom_call.1} parent=11 // pred_check
          %p325 = pneg %p197
        $region34: #{tpu_custom_call.1} parent=11 // pred_check_branch
          %327 = sbr.rel (%p325) target = $region36
        $region35: #{tpu_custom_call.1} parent=11 // pred_region
          _
        $region36: #{tpu_custom_call.1} parent=11 // pred_fallthru
          _
        // Predicated region
        $region37: #{tpu_custom_call.1} parent=11 // pred_check
          %p328 = pneg %p218
        $region38: #{tpu_custom_call.1} parent=11 // pred_check_branch
          %330 = sbr.rel (%p328) target = $region40
        $region39: #{tpu_custom_call.1} parent=11 // pred_region
          _
        $region40: #{tpu_custom_call.1} parent=11 // pred_fallthru
          _
        // Predicated region
        $region41: #{tpu_custom_call.1} parent=11 // pred_check
          %p331 = pneg %p239
        $region42: #{tpu_custom_call.1} parent=11 // pred_check_branch
          %333 = sbr.rel (%p331) target = $region44
        $region43: #{tpu_custom_call.1} parent=11 // pred_region
          %335 = vsyncadd [#allocation5], 0
          %s336 = sshll.u32 %s9, 4
          %s337 = int_to_ptr.hbm [resolvable:$true] %s336
          %s338 = sshll.u32 [#allocation4], 4
          %s339 = int_to_ptr.vmem [resolvable:$true] %s338
          %344 = dma.hbm_to_vmem [thread:$0]  %s337, 2048, %s339, [#allocation5], 128, 128, 8
        $region44: #{tpu_custom_call.1} parent=11 // pred_fallthru
          _
        // Predicated region
        $region45: #{tpu_custom_call.1} parent=11 // pred_check
          %p345 = pneg %p260
        $region46: #{tpu_custom_call.1} parent=11 // pred_check_branch
          %347 = sbr.rel (%p345) target = $region48
        $region47: #{tpu_custom_call.1} parent=11 // pred_region
          _
        $region48: #{tpu_custom_call.1} parent=11 // pred_fallthru
          _
      $region12: #{tpu_custom_call.1} parent=5 // pred_fallthru
        _
      %p348 = scmp.lt.s32.totalorder %s19, 2
      // Predicated region
      $region49: #{tpu_custom_call.1} parent=5 // pred_check
        %p349 = pneg %p348
      $region50: #{tpu_custom_call.1} parent=5 // pred_check_branch
        %351 = sbr.rel (%p349) target = $region52
      $region51: #{tpu_custom_call.1} parent=5 // pred_region
        // Predicated region
        $region53: #{tpu_custom_call.1} parent=51 // pred_check
          %p352 = pneg %p39
        $region54: #{tpu_custom_call.1} parent=51 // pred_check_branch
          %354 = sbr.rel (%p352) target = $region56
        $region55: #{tpu_custom_call.1} parent=51 // pred_region
          %s355 = smul.u32 8, %s19
          %p356 = scmp.lt.s32.totalorder %s355, 15
          %s357 = scalar_select %p356, %s355, 15
          %s358 = smul.addr %s357, 8
          %s359 = scalar_lea.vmem %s0, %s358
          %s360 = smul.u32 8, %s19
        $region56: #{tpu_custom_call.1} parent=51 // pred_fallthru
          _
        // Predicated region
        $region57: #{tpu_custom_call.1} parent=51 // pred_check
          %p361 = pneg %p65
        $region58: #{tpu_custom_call.1} parent=51 // pred_check_branch
          %363 = sbr.rel (%p361) target = $region60
        $region59: #{tpu_custom_call.1} parent=51 // pred_region
          %s364 = smul.u32 8, %s19
          %p365 = scmp.lt.s32.totalorder %s364, 15
          %s366 = scalar_select %p365, %s364, 15
          %s367 = smul.addr %s366, 8
          %s368 = scalar_lea.vmem %s1, %s367
          %s369 = smul.u32 8, %s19
        $region60: #{tpu_custom_call.1} parent=51 // pred_fallthru
          _
      $region52: #{tpu_custom_call.1} parent=5 // pred_fallthru
        _
      %p370 = scmp.le.s32.totalorder 1, %s19
      %p371 = scmp.lt.s32.totalorder %s19, 3
      %p372 = pnand %p370, %p371
      %p373 = pneg %p372
      // Predicated region
      $region61: #{tpu_custom_call.1} parent=5 // pred_check
        _
      $region62: #{tpu_custom_call.1} parent=5 // pred_check_branch
        %375 = sbr.rel (%p372) target = $region64
      $region63: #{tpu_custom_call.1} parent=5 // pred_region
        %s376 = ssub.s32 %s19, 1
        // Predicated region
        $region65: #{tpu_custom_call.1} parent=63 // pred_check
          %p377 = pneg %p113
        $region66: #{tpu_custom_call.1} parent=63 // pred_check_branch
          %379 = sbr.rel (%p377) target = $region68
        $region67: #{tpu_custom_call.1} parent=63 // pred_region
          %381 = dma.done [#allocation3], 16
        $region68: #{tpu_custom_call.1} parent=63 // pred_fallthru
          _
        // Predicated region
        $region69: #{tpu_custom_call.1} parent=63 // pred_check
          %p382 = pneg %p239
        $region70: #{tpu_custom_call.1} parent=63 // pred_check_branch
          %384 = sbr.rel (%p382) target = $region72
        $region71: #{tpu_custom_call.1} parent=63 // pred_region
          %386 = dma.done [#allocation5], 2048
        $region72: #{tpu_custom_call.1} parent=63 // pred_fallthru
          _
        %s387 = smul.u32 8, %s24
        %p388 = scmp.lt.s32.totalorder %s387, 15
        %s389 = scalar_select %p388, %s387, 15
        %s390 = smul.addr %s389, 8
        %s391 = scalar_lea.vmem %s0, %s390
        %p392 = pneg %p45
        %p393 = pneg %p42
        %s394 = smul.u32 8, %s24
        %p395 = scmp.lt.s32.totalorder %s394, 15
        %s396 = scalar_select %p395, %s394, 15
        %s397 = smul.addr %s396, 8
        %s398 = scalar_lea.vmem %s1, %s397
        %p399 = pneg %p71
        %p400 = pneg %p68
        %p401 = pneg %p92
        %p402 = pneg %p89
        %p403 = pneg %p113
        %p404 = pneg %p110
        %p405 = pneg %p134
        %p406 = pneg %p131
        %p407 = pneg %p155
        %p408 = pneg %p152
        %p409 = pneg %p176
        %p410 = pneg %p173
        %p411 = pneg %p197
        %p412 = pneg %p194
        %p413 = pneg %p218
        %p414 = pneg %p215
        %p415 = pneg %p239
        %p416 = pneg %p236
        %p417 = pneg %p260
        %p418 = pneg %p257
        %p419 = pneg %p286
        %p420 = pneg %p283
        %s421 = smul.u32 8, %s24
        %p422 = scmp.lt.s32.totalorder %s421, 15
        %s423 = scalar_select %p422, %s421, 15
        %s424 = smul.addr %s423, 8
        %s425 = scalar_lea.vmem %s11, %s424
        %s426 = smul.u32 8, %s24
        %p427 = scmp.lt.s32.totalorder %s426, 15
        %s428 = scalar_select %p427, %s426, 15
        %s429 = smul.addr %s428, 8
        %s430 = scalar_lea.vmem %s0, %s429
        %s431 = smul.u32 8, %s24
        %s432 = smul.u32 8, %s24
        %p433 = scmp.lt.s32.totalorder %s432, 15
        %s434 = scalar_select %p433, %s432, 15
        %s435 = smul.addr %s434, 8
        %s436 = scalar_lea.vmem %s1, %s435
        %s437 = smul.u32 8, %s24
        %s438 = smul.u32 8, %s24
        %p439 = scmp.lt.s32.totalorder %s438, 15
        %s440 = scalar_select %p439, %s438, 15
        %s441 = smul.addr %s440, 8
        %s442 = scalar_lea.vmem %s11, %s441
        %s443 = smul.u32 8, %s24
        %v444 = vld [vmem:[%s430] sm:$0xff]
        %v445 = vld [vmem:[%s430 + $0x8] sm:$0xff]
        %v446 = vld [vmem:[%s430 + $0x10] sm:$0xff]
        %v447 = vld [vmem:[%s430 + $0x18] sm:$0xff]
        %v448 = vld [vmem:[%s430 + $0x20] sm:$0xff]
        %v449 = vld [vmem:[%s430 + $0x28] sm:$0xff]
        %v450 = vld [vmem:[%s430 + $0x30] sm:$0xff]
        %v451 = vld [vmem:[%s430 + $0x38] sm:$0xff]
        %v452 = vld [vmem:[%s436] sm:$0xff]
        %v453 = vld [vmem:[%s436 + $0x8] sm:$0xff]
        %v454 = vld [vmem:[%s436 + $0x10] sm:$0xff]
        %v455 = vld [vmem:[%s436 + $0x18] sm:$0xff]
        %v456 = vld [vmem:[%s436 + $0x20] sm:$0xff]
        %v457 = vld [vmem:[%s436 + $0x28] sm:$0xff]
        %v458 = vld [vmem:[%s436 + $0x30] sm:$0xff]
        %v459 = vld [vmem:[%s436 + $0x38] sm:$0xff]
        %v460 = vld [vmem:[%s2] sm:$0xff]
        %v461 = vld [vmem:[%s2 + $0x8] sm:$0xff]
        %v462 = vld [vmem:[#allocation2] sm:$0x1]
        %v464 = vperm.slane %v462, 0
        %vm466 = vcmask 130048
        %v468 = vsel %vm466, %v444, 0
        %v471 = vsel %vm466, %v445, 0
        %v474 = vsel %vm466, %v446, 0
        %v477 = vsel %vm466, %v447, 0
        %v480 = vsel %vm466, %v448, 0
        %v483 = vsel %vm466, %v449, 0
        %v486 = vsel %vm466, %v450, 0
        %v489 = vsel %vm466, %v451, 0
        %491 = vmatpush.msra.mxu0 0.0
        %492 = vmatpush.msra.mxu0 0.0
        %493 = vmatpush.msra.mxu0 0.0
        %494 = vmatpush.msra.mxu0 0.0
        %495 = vmatpush.msra.mxu0 0.0
        %496 = vmatpush.msra.mxu0 0.0
        %497 = vmatpush.msra.mxu0 0.0
        %498 = vmatpush.msra.mxu0 0.0
        %499 = vmatpush.msra.mxu0 0.0
        %500 = vmatpush.msra.mxu0 0.0
        %501 = vmatpush.msra.mxu0 0.0
        %502 = vmatpush.msra.mxu0 0.0
        %503 = vmatpush.msra.mxu0 0.0
        %504 = vmatpush.msra.mxu0 0.0
        %505 = vmatpush.msra.mxu0 %v461
        %506 = vmatpush.msra.mxu0 %v460
        %507 = vmatmul.f32.gmra.mxu0 %v468
        %v508 = vpop.f32.mrf.mxu0
        %v509 = vadd.f32 %v464, %v508
        %510 = vmatmul.f32.gmra.mxu0 %v471
        %v511 = vpop.f32.mrf.mxu0
        %v512 = vadd.f32 %v464, %v511
        %513 = vmatmul.f32.gmra.mxu0 %v474
        %v514 = vpop.f32.mrf.mxu0
        %v515 = vadd.f32 %v464, %v514
        %516 = vmatmul.f32.gmra.mxu0 %v477
        %v517 = vpop.f32.mrf.mxu0
        %v518 = vadd.f32 %v464, %v517
        %519 = vmatmul.f32.gmra.mxu0 %v480
        %v520 = vpop.f32.mrf.mxu0
        %v521 = vadd.f32 %v464, %v520
        %522 = vmatmul.f32.gmra.mxu0 %v483
        %v523 = vpop.f32.mrf.mxu0
        %v524 = vadd.f32 %v464, %v523
        %525 = vmatmul.f32.gmra.mxu0 %v486
        %v526 = vpop.f32.mrf.mxu0
        %v527 = vadd.f32 %v464, %v526
        %528 = vmatmul.f32.gmra.mxu0 %v489
        %v529 = vpop.f32.mrf.mxu0
        %v530 = vadd.f32 %v464, %v529
        %531 = vdwg.mxu0
        %v532 = vmax.f32 %v509, 0.0
        %v533 = vmax.f32 %v512, 0.0
        %v534 = vmax.f32 %v515, 0.0
        %v535 = vmax.f32 %v518, 0.0
        %v536 = vmax.f32 %v521, 0.0
        %v537 = vmax.f32 %v524, 0.0
        %v538 = vmax.f32 %v527, 0.0
        %v539 = vmax.f32 %v530, 0.0
        %v540 = vld [vmem:[%s4] sm:$0xff]
        %v541 = vld [vmem:[%s4 + $0x8] sm:$0xff]
        %v542 = vld [vmem:[%s4 + $0x10] sm:$0xff]
        %v543 = vld [vmem:[%s4 + $0x18] sm:$0xff]
        %v544 = vld [vmem:[%s4 + $0x20] sm:$0xff]
        %v545 = vld [vmem:[%s4 + $0x28] sm:$0xff]
        %v546 = vld [vmem:[%s4 + $0x30] sm:$0xff]
        %v547 = vld [vmem:[%s4 + $0x38] sm:$0xff]
        %v548 = vld [vmem:[%s4 + $0x40] sm:$0xff]
        %v549 = vld [vmem:[%s4 + $0x48] sm:$0xff]
        %v550 = vld [vmem:[%s4 + $0x50] sm:$0xff]
        %v551 = vld [vmem:[%s4 + $0x58] sm:$0xff]
        %v552 = vld [vmem:[%s4 + $0x60] sm:$0xff]
        %v553 = vld [vmem:[%s4 + $0x68] sm:$0xff]
        %v554 = vld [vmem:[%s4 + $0x70] sm:$0xff]
        %v555 = vld [vmem:[%s4 + $0x78] sm:$0xff]
        %v556 = vld [vmem:[%s5] sm:$0x1]
        %v558 = vperm.slane %v556, 0
        %560 = vmatpush.msra.mxu0 %v555
        %561 = vmatpush.msra.mxu0 %v554
        %562 = vmatpush.msra.mxu0 %v553
        %563 = vmatpush.msra.mxu0 %v552
        %564 = vmatpush.msra.mxu0 %v551
        %565 = vmatpush.msra.mxu0 %v550
        %566 = vmatpush.msra.mxu0 %v549
        %567 = vmatpush.msra.mxu0 %v548
        %568 = vmatpush.msra.mxu0 %v547
        %569 = vmatpush.msra.mxu0 %v546
        %570 = vmatpush.msra.mxu0 %v545
        %571 = vmatpush.msra.mxu0 %v544
        %572 = vmatpush.msra.mxu0 %v543
        %573 = vmatpush.msra.mxu0 %v542
        %574 = vmatpush.msra.mxu0 %v541
        %575 = vmatpush.msra.mxu0 %v540
        %576 = vmatmul.f32.gmra.mxu0 %v532
        %v577 = vpop.f32.mrf.mxu0
        %v578 = vadd.f32 %v558, %v577
        %579 = vmatmul.f32.gmra.mxu0 %v533
        %v580 = vpop.f32.mrf.mxu0
        %v581 = vadd.f32 %v558, %v580
        %582 = vmatmul.f32.gmra.mxu0 %v534
        %v583 = vpop.f32.mrf.mxu0
        %v584 = vadd.f32 %v558, %v583
        %585 = vmatmul.f32.gmra.mxu0 %v535
        %v586 = vpop.f32.mrf.mxu0
        %v587 = vadd.f32 %v558, %v586
        %588 = vmatmul.f32.gmra.mxu0 %v536
        %v589 = vpop.f32.mrf.mxu0
        %v590 = vadd.f32 %v558, %v589
        %591 = vmatmul.f32.gmra.mxu0 %v537
        %v592 = vpop.f32.mrf.mxu0
        %v593 = vadd.f32 %v558, %v592
        %594 = vmatmul.f32.gmra.mxu0 %v538
        %v595 = vpop.f32.mrf.mxu0
        %v596 = vadd.f32 %v558, %v595
        %597 = vmatmul.f32.gmra.mxu0 %v539
        %v598 = vpop.f32.mrf.mxu0
        %v599 = vadd.f32 %v558, %v598
        %600 = vdwg.mxu0
        %v601 = vmax.f32 %v578, 0.0
        %v602 = vmax.f32 %v581, 0.0
        %v603 = vmax.f32 %v584, 0.0
        %v604 = vmax.f32 %v587, 0.0
        %v605 = vmax.f32 %v590, 0.0
        %v606 = vmax.f32 %v593, 0.0
        %v607 = vmax.f32 %v596, 0.0
        %v608 = vmax.f32 %v599, 0.0
        %v609 = vld [vmem:[%s6] sm:$0xff]
        %v610 = vld [vmem:[%s6 + $0x8] sm:$0xff]
        %v611 = vld [vmem:[%s6 + $0x10] sm:$0xff]
        %v612 = vld [vmem:[%s6 + $0x18] sm:$0xff]
        %v613 = vld [vmem:[%s6 + $0x20] sm:$0xff]
        %v614 = vld [vmem:[%s6 + $0x28] sm:$0xff]
        %v615 = vld [vmem:[%s6 + $0x30] sm:$0xff]
        %v616 = vld [vmem:[%s6 + $0x38] sm:$0xff]
        %v617 = vld [vmem:[%s6 + $0x40] sm:$0xff]
        %v618 = vld [vmem:[%s6 + $0x48] sm:$0xff]
        %v619 = vld [vmem:[%s6 + $0x50] sm:$0xff]
        %v620 = vld [vmem:[%s6 + $0x58] sm:$0xff]
        %v621 = vld [vmem:[%s6 + $0x60] sm:$0xff]
        %v622 = vld [vmem:[%s6 + $0x68] sm:$0xff]
        %v623 = vld [vmem:[%s6 + $0x70] sm:$0xff]
        %v624 = vld [vmem:[%s6 + $0x78] sm:$0xff]
        %v625 = vld [vmem:[%s7] sm:$0xff]
        %v626 = vld [vmem:[%s7 + $0x8] sm:$0xff]
        %v628 = vsel %vm466, %v452, 0
        %v631 = vsel %vm466, %v453, 0
        %v634 = vsel %vm466, %v454, 0
        %v637 = vsel %vm466, %v455, 0
        %v640 = vsel %vm466, %v456, 0
        %v643 = vsel %vm466, %v457, 0
        %v646 = vsel %vm466, %v458, 0
        %v649 = vsel %vm466, %v459, 0
        %651 = vmatpush.msra.mxu0 0.0
        %652 = vmatpush.msra.mxu0 0.0
        %653 = vmatpush.msra.mxu0 0.0
        %654 = vmatpush.msra.mxu0 0.0
        %655 = vmatpush.msra.mxu0 0.0
        %656 = vmatpush.msra.mxu0 0.0
        %657 = vmatpush.msra.mxu0 0.0
        %658 = vmatpush.msra.mxu0 0.0
        %659 = vmatpush.msra.mxu0 0.0
        %660 = vmatpush.msra.mxu0 0.0
        %661 = vmatpush.msra.mxu0 0.0
        %662 = vmatpush.msra.mxu0 0.0
        %663 = vmatpush.msra.mxu0 0.0
        %664 = vmatpush.msra.mxu0 0.0
        %665 = vmatpush.msra.mxu0 %v626
        %666 = vmatpush.msra.mxu0 %v625
        %667 = vmatmul.f32.gmra.mxu0 %v628
        %v668 = vpop.f32.mrf.mxu0
        %v669 = vadd.f32 0.0, %v668
        %670 = vmatmul.f32.gmra.mxu0 %v631
        %v671 = vpop.f32.mrf.mxu0
        %v672 = vadd.f32 0.0, %v671
        %673 = vmatmul.f32.gmra.mxu0 %v634
        %v674 = vpop.f32.mrf.mxu0
        %v675 = vadd.f32 0.0, %v674
        %676 = vmatmul.f32.gmra.mxu0 %v637
        %v677 = vpop.f32.mrf.mxu0
        %v678 = vadd.f32 0.0, %v677
        %679 = vmatmul.f32.gmra.mxu0 %v640
        %v680 = vpop.f32.mrf.mxu0
        %v681 = vadd.f32 0.0, %v680
        %682 = vmatmul.f32.gmra.mxu0 %v643
        %v683 = vpop.f32.mrf.mxu0
        %v684 = vadd.f32 0.0, %v683
        %685 = vmatmul.f32.gmra.mxu0 %v646
        %v686 = vpop.f32.mrf.mxu0
        %v687 = vadd.f32 0.0, %v686
        %688 = vmatmul.f32.gmra.mxu0 %v649
        %v689 = vpop.f32.mrf.mxu0
        %v690 = vadd.f32 0.0, %v689
        %691 = vdwg.mxu0
        %692 = vmatpush.msra.mxu0 %v624
        %693 = vmatpush.msra.mxu0 %v623
        %694 = vmatpush.msra.mxu0 %v622
        %695 = vmatpush.msra.mxu0 %v621
        %696 = vmatpush.msra.mxu0 %v620
        %697 = vmatpush.msra.mxu0 %v619
        %698 = vmatpush.msra.mxu0 %v618
        %699 = vmatpush.msra.mxu0 %v617
        %700 = vmatpush.msra.mxu0 %v616
        %701 = vmatpush.msra.mxu0 %v615
        %702 = vmatpush.msra.mxu0 %v614
        %703 = vmatpush.msra.mxu0 %v613
        %704 = vmatpush.msra.mxu0 %v612
        %705 = vmatpush.msra.mxu0 %v611
        %706 = vmatpush.msra.mxu0 %v610
        %707 = vmatpush.msra.mxu0 %v609
        %708 = vmatmul.f32.gmra.mxu0 %v601
        %v709 = vpop.f32.mrf.mxu0
        %v710 = vadd.f32 %v669, %v709
        %711 = vmatmul.f32.gmra.mxu0 %v602
        %v712 = vpop.f32.mrf.mxu0
        %v713 = vadd.f32 %v672, %v712
        %714 = vmatmul.f32.gmra.mxu0 %v603
        %v715 = vpop.f32.mrf.mxu0
        %v716 = vadd.f32 %v675, %v715
        %717 = vmatmul.f32.gmra.mxu0 %v604
        %v718 = vpop.f32.mrf.mxu0
        %v719 = vadd.f32 %v678, %v718
        %720 = vmatmul.f32.gmra.mxu0 %v605
        %v721 = vpop.f32.mrf.mxu0
        %v722 = vadd.f32 %v681, %v721
        %723 = vmatmul.f32.gmra.mxu0 %v606
        %v724 = vpop.f32.mrf.mxu0
        %v725 = vadd.f32 %v684, %v724
        %726 = vmatmul.f32.gmra.mxu0 %v607
        %v727 = vpop.f32.mrf.mxu0
        %v728 = vadd.f32 %v687, %v727
        %729 = vmatmul.f32.gmra.mxu0 %v608
        %v730 = vpop.f32.mrf.mxu0
        %v731 = vadd.f32 %v690, %v730
        %732 = vdwg.mxu0
        %v733 = vld [vmem:[%s8] sm:$0x1]
        %v735 = vperm.slane %v733, 0
        %v737 = vadd.f32 %v710, %v735
        %v738 = vadd.f32 %v713, %v735
        %v739 = vadd.f32 %v716, %v735
        %v740 = vadd.f32 %v719, %v735
        %v741 = vadd.f32 %v722, %v735
        %v742 = vadd.f32 %v725, %v735
        %v743 = vadd.f32 %v728, %v735
        %v744 = vadd.f32 %v731, %v735
        %v745 = vmax.f32 %v737, 0.0
        %v746 = vmax.f32 %v738, 0.0
        %v747 = vmax.f32 %v739, 0.0
        %v748 = vmax.f32 %v740, 0.0
        %v749 = vmax.f32 %v741, 0.0
        %v750 = vmax.f32 %v742, 0.0
        %v751 = vmax.f32 %v743, 0.0
        %v752 = vmax.f32 %v744, 0.0
        %v753 = vld [vmem:[#allocation4] sm:$0xff]
        %v754 = vld [vmem:[#allocation4 + $0x8] sm:$0xff]
        %v755 = vld [vmem:[#allocation4 + $0x10] sm:$0xff]
        %v756 = vld [vmem:[#allocation4 + $0x18] sm:$0xff]
        %v757 = vld [vmem:[#allocation4 + $0x20] sm:$0xff]
        %v758 = vld [vmem:[#allocation4 + $0x28] sm:$0xff]
        %v759 = vld [vmem:[#allocation4 + $0x30] sm:$0xff]
        %v760 = vld [vmem:[#allocation4 + $0x38] sm:$0xff]
        %v761 = vld [vmem:[#allocation4 + $0x40] sm:$0xff]
        %v762 = vld [vmem:[#allocation4 + $0x48] sm:$0xff]
        %v763 = vld [vmem:[#allocation4 + $0x50] sm:$0xff]
        %v764 = vld [vmem:[#allocation4 + $0x58] sm:$0xff]
        %v765 = vld [vmem:[#allocation4 + $0x60] sm:$0xff]
        %v766 = vld [vmem:[#allocation4 + $0x68] sm:$0xff]
        %v767 = vld [vmem:[#allocation4 + $0x70] sm:$0xff]
        %v768 = vld [vmem:[#allocation4 + $0x78] sm:$0xff]
        %v769 = vld [vmem:[%s10] sm:$0x1]
        %v771 = vperm.slane %v769, 0
        %773 = vmatpush.msra.mxu0 %v768
        %774 = vmatpush.msra.mxu0 %v767
        %775 = vmatpush.msra.mxu0 %v766
        %776 = vmatpush.msra.mxu0 %v765
        %777 = vmatpush.msra.mxu0 %v764
        %778 = vmatpush.msra.mxu0 %v763
        %779 = vmatpush.msra.mxu0 %v762
        %780 = vmatpush.msra.mxu0 %v761
        %781 = vmatpush.msra.mxu0 %v760
        %782 = vmatpush.msra.mxu0 %v759
        %783 = vmatpush.msra.mxu0 %v758
        %784 = vmatpush.msra.mxu0 %v757
        %785 = vmatpush.msra.mxu0 %v756
        %786 = vmatpush.msra.mxu0 %v755
        %787 = vmatpush.msra.mxu0 %v754
        %788 = vmatpush.msra.mxu0 %v753
        %789 = vmatmul.f32.gmra.mxu0 %v745
        %v790 = vpop.f32.mrf.mxu0
        %v791 = vadd.f32 %v771, %v790
        %792 = vmatmul.f32.gmra.mxu0 %v746
        %v793 = vpop.f32.mrf.mxu0
        %v794 = vadd.f32 %v771, %v793
        %795 = vmatmul.f32.gmra.mxu0 %v747
        %v796 = vpop.f32.mrf.mxu0
        %v797 = vadd.f32 %v771, %v796
        %798 = vmatmul.f32.gmra.mxu0 %v748
        %v799 = vpop.f32.mrf.mxu0
        %v800 = vadd.f32 %v771, %v799
        %801 = vmatmul.f32.gmra.mxu0 %v749
        %v802 = vpop.f32.mrf.mxu0
        %v803 = vadd.f32 %v771, %v802
        %804 = vmatmul.f32.gmra.mxu0 %v750
        %v805 = vpop.f32.mrf.mxu0
        %v806 = vadd.f32 %v771, %v805
        %807 = vmatmul.f32.gmra.mxu0 %v751
        %v808 = vpop.f32.mrf.mxu0
        %v809 = vadd.f32 %v771, %v808
        %810 = vmatmul.f32.gmra.mxu0 %v752
        %v811 = vpop.f32.mrf.mxu0
        %v812 = vadd.f32 %v771, %v811
        %813 = vdwg.mxu0
        %v814 = vmax.f32 %v791, 0.0
        %v815 = vmax.f32 %v794, 0.0
        %v816 = vmax.f32 %v797, 0.0
        %v817 = vmax.f32 %v800, 0.0
        %v818 = vmax.f32 %v803, 0.0
        %v819 = vmax.f32 %v806, 0.0
        %v820 = vmax.f32 %v809, 0.0
        %v821 = vmax.f32 %v812, 0.0
        %vm822 = vcmask 261120
        %823 = vst.msk [vmem:[%s442] sm:$0xff] %vm822, %v814
        %824 = vst.msk [vmem:[%s442 + $0x8] sm:$0xff] %vm822, %v815
        %825 = vst.msk [vmem:[%s442 + $0x10] sm:$0xff] %vm822, %v816
        %826 = vst.msk [vmem:[%s442 + $0x18] sm:$0xff] %vm822, %v817
        %827 = vst.msk [vmem:[%s442 + $0x20] sm:$0xff] %vm822, %v818
        %828 = vst.msk [vmem:[%s442 + $0x28] sm:$0xff] %vm822, %v819
        %829 = vst.msk [vmem:[%s442 + $0x30] sm:$0xff] %vm822, %v820
        %830 = vst.msk [vmem:[%s442 + $0x38] sm:$0xff] %vm822, %v821
        %s831 = smul.u32 8, %s24
        %p832 = scmp.lt.s32.totalorder %s831, 15
        %s833 = scalar_select %p832, %s831, 15
        %s834 = smul.addr %s833, 8
        %s835 = scalar_lea.vmem %s11, %s834
        // Predicated region
        $region73: #{tpu_custom_call.1} parent=63 // pred_check
          %p836 = pneg %p283
        $region74: #{tpu_custom_call.1} parent=63 // pred_check_branch
          %838 = sbr.rel (%p836) target = $region76
        $region75: #{tpu_custom_call.1} parent=63 // pred_region
          %s839 = smul.u32 8, %s24
        $region76: #{tpu_custom_call.1} parent=63 // pred_fallthru
          _
      $region64: #{tpu_custom_call.1} parent=5 // pred_fallthru
        _
      %p840 = scmp.le.s32.totalorder 2, %s19
      // Predicated region
      $region77: #{tpu_custom_call.1} parent=5 // pred_check
        %p841 = pneg %p840
      $region78: #{tpu_custom_call.1} parent=5 // pred_check_branch
        %843 = sbr.rel (%p841) target = $region80
      $region79: #{tpu_custom_call.1} parent=5 // pred_region
        %s844 = ssub.s32 %s19, 2
        // Predicated region
        $region81: #{tpu_custom_call.1} parent=79 // pred_check
          %p845 = pneg %p289
        $region82: #{tpu_custom_call.1} parent=79 // pred_check_branch
          %847 = sbr.rel (%p845) target = $region84
        $region83: #{tpu_custom_call.1} parent=79 // pred_region
          %s848 = smul.u32 8, %s25
          %p849 = scmp.lt.s32.totalorder %s848, 15
          %s850 = scalar_select %p849, %s848, 15
          %s851 = smul.addr %s850, 8
          %s852 = scalar_lea.vmem %s11, %s851
        $region84: #{tpu_custom_call.1} parent=79 // pred_fallthru
          _
      $region80: #{tpu_custom_call.1} parent=5 // pred_fallthru
        _
    $region6: #{tpu_custom_call.1} parent=1 // loop_footer
      %s23 = sadd.s32 1, %s19
    $region7: #{tpu_custom_call.1} parent=1 // loop_footer_branch
      %18 = sbr.rel target = $region3
    $region8: #{tpu_custom_call.1} parent=1 // loop_exit
      _
    %853 = vsyncpa [#allocation3], 1
    %s854 = scalar_lea.sflag [#allocation3], 1
    %855 = vsyncpa %s854, 1
    %856 = vsyncpa [#allocation5], 1

</llo_original>
